<compile_context>
chip_gen: v5e
topology: v5e:2x2
jax: 0.10.0
libtpu: 0.0.40
codegen_flags: <defaults>
</compile_context>

<pallas_src>
import numpy as np
import jax
import jax.numpy as jnp
from jax.experimental import pallas as pl
from jax.experimental.pallas import tpu as pltpu


def fm_kernel(idx_ref, w_ref, fc_ref, bias_ref, out_ref):
    # idx_ref : (F, TB)  int32  field-major indices, batch on lanes
    # w_ref   : (E, Vp)  f32    embedding table (transposed, vocab padded to 8)
    # fc_ref  : (1, Vp)  f32    linear table (transposed)
    # bias_ref: (1,)     f32    SMEM scalar
    # out_ref : (1, TB)  f32    lane-dense output
    idx = idx_ref[...]                                     # (F, TB)
    num_fields, tb = idx.shape
    emb_t = w_ref[...]                                     # (E, Vp)
    vp = emb_t.shape[1]

    # Fused gather: multi-hot counts over the (tiny) vocabulary, batch on lanes.
    v_iota = jax.lax.broadcasted_iota(jnp.int32, (vp, tb), 0)
    m = (v_iota == idx[0:1, :]).astype(jnp.float32)        # (Vp, TB)
    for f in range(1, num_fields):                         # static unroll over fields
        m = m + (v_iota == idx[f:f + 1, :]).astype(jnp.float32)

    hi = jax.lax.Precision.HIGHEST
    # sum_f emb[idx]   and   sum_f emb[idx]^2   via one MXU pass each
    s = jnp.dot(emb_t, m, precision=hi, preferred_element_type=jnp.float32)          # (E, TB)
    q = jnp.dot(emb_t * emb_t, m, precision=hi, preferred_element_type=jnp.float32)  # (E, TB)
    lin = jnp.dot(fc_ref[...], m, precision=hi, preferred_element_type=jnp.float32)  # (1, TB)

    # FactorizationMachine(reduce_sum=True): sublane (XLU) reduce over E
    second = 0.5 * jnp.sum(s * s - q, axis=0, keepdims=True)                          # (1, TB)
    out_ref[...] = jax.nn.sigmoid(lin + second + bias_ref[0])                         # EUP sigmoid


def fm_forward_pallas(idx_t, w_t, fc_t, bias, *, tile_b=16384):
    """idx_t: (F, B) int32, w_t: (E, Vp) f32, fc_t: (1, Vp) f32, bias: (1,) f32 -> (B,) f32."""
    num_fields, B = idx_t.shape
    embed_dim, vp = w_t.shape

    # Cap the tile by a conservative VMEM budget: multihot (Vp,TB) + s/q (E,TB)
    # + elementwise temps + double-buffered idx/out.  Budget kept well below
    # the v7x 64 MiB physical VMEM.
    per_lane_bytes = 4 * (vp + 4 * embed_dim + 2 * num_fields + 16)
    vmem_budget = 20 * 1024 * 1024
    cap = max(128, (vmem_budget // per_lane_bytes) // 128 * 128)
    tile_b = max(128, (min(tile_b, cap) // 128) * 128)

    b128 = pl.cdiv(B, 128) * 128
    if b128 <= tile_b:
        # One step covers the whole batch.  Split in two only when each half is
        # still roofline-sized (lets v7x shard across both TensorCores without
        # penalizing single-TC v5e/v6e on small batches).
        tile_b = pl.cdiv(b128 // 2, 128) * 128 if b128 >= 2 * 4096 else b128
    b_pad = pl.cdiv(B, tile_b) * tile_b

    if b_pad != B:
        # Pad the tiny int32 index tensor, never the gathered embeddings.
        idx_t = jnp.pad(idx_t, ((0, 0), (0, b_pad - B)))

    grid = (b_pad // tile_b,)
    flops_per_row = 2 * vp * (2 * embed_dim + 1) + num_fields * vp + 6 * embed_dim
    cost = pl.CostEstimate(
        flops=int(b_pad) * int(flops_per_row),
        transcendentals=int(b_pad),
        bytes_accessed=int(b_pad) * (num_fields + 1) * 4 + (2 * embed_dim + 1) * vp * 4,
    )

    out = pl.pallas_call(
        fm_kernel,
        out_shape=jax.ShapeDtypeStruct((1, b_pad), jnp.float32),
        grid=grid,
        in_specs=[
            pl.BlockSpec((num_fields, tile_b), lambda i: (0, i)),   # idx tile
            pl.BlockSpec((embed_dim, vp), lambda i: (0, 0)),        # table^T (resident)
            pl.BlockSpec((1, vp), lambda i: (0, 0)),                # fc^T    (resident)
            pl.BlockSpec(memory_space=pltpu.MemorySpace.SMEM),      # bias scalar
        ],
        out_specs=pl.BlockSpec((1, tile_b), lambda i: (0, i)),
        compiler_params=pltpu.CompilerParams(
            dimension_semantics=("parallel",),
            vmem_limit_bytes=48 * 1024 * 1024,
        ),
        cost_estimate=cost,
    )(idx_t, w_t, fc_t, bias)
    return out[0, :B]   # drop batch padding; == .squeeze(1) of the (B,1) logits


def fm_implicit_forward(x, embed_table, fc_table, bias, offsets, *, tile_b=16384):
    """Full FM_implicit.forward.  Only the int32 indices and the tiny tables
    cross the pallas_call boundary; the gather happens inside the kernel."""
    vocab, embed_dim = embed_table.shape
    idx = x.astype(jnp.int32) + offsets[None, :].astype(jnp.int32)   # (B, F)
    idx_t = jnp.transpose(idx)                                       # (F, B) tiny int transpose

    vp = ((vocab + 7) // 8) * 8
    w_t = jnp.zeros((embed_dim, vp), jnp.float32).at[:, :vocab].set(embed_table.T)
    fc_t = jnp.zeros((1, vp), jnp.float32).at[:, :vocab].set(fc_table[:, 0][None, :])
    return fm_forward_pallas(idx_t, w_t, fc_t, bias.astype(jnp.float32), tile_b=tile_b)


def fm_forward_reference(emb_bfe, lin_bf, bias):
    s = jnp.sum(emb_bfe, axis=1)
    ix = jnp.sum(s * s - jnp.sum(emb_bfe * emb_bfe, axis=1), axis=1, keepdims=True)
    first = jnp.sum(lin_bf, axis=1, keepdims=True) + bias
    return jax.nn.sigmoid((first + 0.5 * ix)[:, 0])


if __name__ == "__main__":
    # Small, deterministic synthetic setup consistent with the module.
    field_dims = [3, 4, 5, 6]          # num_fields = 4, vocab = 18
    embed_dim = 16
    B = 200                            # exercises batch padding
    num_fields = len(field_dims)
    vocab = int(np.sum(field_dims))

    key = jax.random.PRNGKey(0)
    k_emb, k_fc, k_x = jax.random.split(key, 3)

    # FeaturesEmbedding: xavier_uniform_ on (vocab, embed_dim)
    limit = float(np.sqrt(6.0 / (vocab + embed_dim)))
    embed_table = jax.random.uniform(
        k_emb, (vocab, embed_dim), jnp.float32, minval=-limit, maxval=limit)
    # FeaturesLinear: Embedding(vocab, 1) + zero bias
    fc_table = jax.random.normal(k_fc, (vocab, 1), jnp.float32) * 0.01
    bias = jnp.zeros((1,), jnp.float32)

    # Input indices: x[:, f] in [0, field_dims[f])
    cols = []
    for f, d in enumerate(field_dims):
        kf = jax.random.fold_in(k_x, f)
        cols.append(jax.random.randint(kf, (B,), 0, d, dtype=jnp.int32))
    x = jnp.stack(cols, axis=1)                           # (B, num_fields) int32

    offsets = jnp.asarray(
        np.concatenate(([0], np.cumsum(field_dims)[:-1])), dtype=jnp.int32)

    out = fm_implicit_forward(x, embed_table, fc_table, bias, offsets)
    out = jax.block_until_ready(out)

    # Reference in the natural (B, F, E) layout (gather done in plain JAX).
    idx = x + offsets[None, :]
    ref = fm_forward_reference(embed_table[idx], fc_table[idx][..., 0], bias)
    np.testing.assert_allclose(np.asarray(out), np.asarray(ref),
                               rtol=1e-5, atol=1e-5)
    print("KERNEL_OK")
</pallas_src>

<mosaic_0001>
module attributes {stable_mosaic.version = 11 : i64} {
  func.func @fm_kernel(%arg0: i32, %arg1: memref<4x256xi32, #tpu.memory_space<vmem>>, %arg2: memref<16x24xf32, #tpu.memory_space<vmem>>, %arg3: memref<1x24xf32, #tpu.memory_space<vmem>>, %arg4: memref<1xf32, #tpu.memory_space<smem>>, %arg5: memref<1x256xf32, #tpu.memory_space<vmem>>) attributes {dimension_semantics = [#tpu.dimension_semantics<parallel>], iteration_bounds = array<i64: 1>, scalar_prefetch = 0 : i64, scratch_operands = 0 : i64, tpu.core_type = #tpu.core_type<tc>, window_params = [{transform_indices = @transform_0, window_bounds = array<i64: 4, 256>}, {pipeline_mode = #tpu.pipeline_mode<synchronous>, transform_indices = @transform_1, window_bounds = array<i64: 16, 24>}, {pipeline_mode = #tpu.pipeline_mode<synchronous>, transform_indices = @transform_2, window_bounds = array<i64: 1, 24>}, {transform_indices = @transform_3, window_bounds = array<i64: 1>}, {transform_indices = @transform_4, window_bounds = array<i64: 1, 256>}]} {
    %c0 = arith.constant 0 : index
    %c0_0 = arith.constant 0 : index
    %0 = vector.load %arg1[%c0, %c0_0] : memref<4x256xi32, #tpu.memory_space<vmem>>, vector<4x256xi32>
    %c0_1 = arith.constant 0 : index
    %c0_2 = arith.constant 0 : index
    %1 = vector.load %arg2[%c0_1, %c0_2] : memref<16x24xf32, #tpu.memory_space<vmem>>, vector<16x24xf32>
    %2 = tpu.iota {dimensions = array<i32: 0>} : vector<24x256xi32>
    %3 = vector.extract_strided_slice %0 {offsets = [0, 0], sizes = [1, 256], strides = [1, 1]} : vector<4x256xi32> to vector<1x256xi32>
    %4 = vector.broadcast %3 : vector<1x256xi32> to vector<24x256xi32>
    %5 = arith.cmpi eq, %2, %4 : vector<24x256xi32>
    %6 = arith.extui %5 : vector<24x256xi1> to vector<24x256xi32>
    %7 = arith.sitofp %6 : vector<24x256xi32> to vector<24x256xf32>
    %8 = vector.extract_strided_slice %0 {offsets = [1, 0], sizes = [1, 256], strides = [1, 1]} : vector<4x256xi32> to vector<1x256xi32>
    %9 = vector.broadcast %8 : vector<1x256xi32> to vector<24x256xi32>
    %10 = arith.cmpi eq, %2, %9 : vector<24x256xi32>
    %11 = arith.extui %10 : vector<24x256xi1> to vector<24x256xi32>
    %12 = arith.sitofp %11 : vector<24x256xi32> to vector<24x256xf32>
    %13 = arith.addf %7, %12 : vector<24x256xf32>
    %14 = vector.extract_strided_slice %0 {offsets = [2, 0], sizes = [1, 256], strides = [1, 1]} : vector<4x256xi32> to vector<1x256xi32>
    %15 = vector.broadcast %14 : vector<1x256xi32> to vector<24x256xi32>
    %16 = arith.cmpi eq, %2, %15 : vector<24x256xi32>
    %17 = arith.extui %16 : vector<24x256xi1> to vector<24x256xi32>
    %18 = arith.sitofp %17 : vector<24x256xi32> to vector<24x256xf32>
    %19 = arith.addf %13, %18 : vector<24x256xf32>
    %20 = vector.extract_strided_slice %0 {offsets = [3, 0], sizes = [1, 256], strides = [1, 1]} : vector<4x256xi32> to vector<1x256xi32>
    %21 = vector.broadcast %20 : vector<1x256xi32> to vector<24x256xi32>
    %22 = arith.cmpi eq, %2, %21 : vector<24x256xi32>
    %23 = arith.extui %22 : vector<24x256xi1> to vector<24x256xi32>
    %24 = arith.sitofp %23 : vector<24x256xi32> to vector<24x256xf32>
    %25 = arith.addf %19, %24 : vector<24x256xf32>
    %cst = arith.constant dense<0.000000e+00> : vector<16x256xf32>
    %26 = tpu.matmul %1, %25, %cst {dimension_numbers = #tpu.dot_dimension_numbers<[1], [0], [0], [1], [0, 0, 1, 1], [], []>, precision = #tpu.contract_precision<fp32>} : vector<16x24xf32>, vector<24x256xf32>, vector<16x256xf32> -> vector<16x256xf32>
    %27 = arith.mulf %1, %1 : vector<16x24xf32>
    %cst_3 = arith.constant dense<0.000000e+00> : vector<16x256xf32>
    %28 = tpu.matmul %27, %25, %cst_3 {dimension_numbers = #tpu.dot_dimension_numbers<[1], [0], [0], [1], [0, 0, 1, 1], [], []>, precision = #tpu.contract_precision<fp32>} : vector<16x24xf32>, vector<24x256xf32>, vector<16x256xf32> -> vector<16x256xf32>
    %c0_4 = arith.constant 0 : index
    %c0_5 = arith.constant 0 : index
    %29 = vector.load %arg3[%c0_4, %c0_5] : memref<1x24xf32, #tpu.memory_space<vmem>>, vector<1x24xf32>
    %cst_6 = arith.constant dense<0.000000e+00> : vector<1x256xf32>
    %30 = tpu.matmul %29, %25, %cst_6 {dimension_numbers = #tpu.dot_dimension_numbers<[1], [0], [0], [1], [0, 0, 1, 1], [], []>, precision = #tpu.contract_precision<fp32>} : vector<1x24xf32>, vector<24x256xf32>, vector<1x256xf32> -> vector<1x256xf32>
    %31 = arith.mulf %26, %26 : vector<16x256xf32>
    %32 = arith.subf %31, %28 : vector<16x256xf32>
    %cst_7 = arith.constant dense<0.000000e+00> : vector<256xf32>
    %33 = vector.multi_reduction <add>, %32, %cst_7 [0] : vector<16x256xf32> to vector<256xf32>
    %34 = vector.shape_cast %33 : vector<256xf32> to vector<1x256xf32>
    %cst_8 = arith.constant 5.000000e-01 : f32
    %35 = vector.broadcast %cst_8 : f32 to vector<1x256xf32>
    %36 = arith.mulf %35, %34 : vector<1x256xf32>
    %37 = arith.addf %30, %36 : vector<1x256xf32>
    %c0_9 = arith.constant 0 : index
    %38 = memref.load %arg4[%c0_9] : memref<1xf32, #tpu.memory_space<smem>>
    %39 = vector.broadcast %38 : f32 to vector<1x256xf32>
    %40 = arith.addf %37, %39 : vector<1x256xf32>
    %41 = arith.negf %40 : vector<1x256xf32>
    %42 = math.exp %41 : vector<1x256xf32>
    %cst_10 = arith.constant 1.000000e+00 : f32
    %43 = vector.broadcast %cst_10 : f32 to vector<1x256xf32>
    %44 = arith.addf %43, %42 : vector<1x256xf32>
    %45 = arith.divf %43, %44 : vector<1x256xf32>
    %c0_11 = arith.constant 0 : index
    %c0_12 = arith.constant 0 : index
    %46 = vector.load %arg5[%c0_11, %c0_12] : memref<1x256xf32, #tpu.memory_space<vmem>>, vector<1x256xf32>
    tpu.vector_store %arg5[%c0_11, %c0_12], %45 {strides = array<i32>} : memref<1x256xf32, #tpu.memory_space<vmem>>, vector<1x256xf32>,
    return
  }
  func.func @transform_0(%arg0: i32) -> (i32, i32) {
    %c0_i32 = arith.constant 0 : i32
    %c0_i32_0 = arith.constant 0 : i32
    return %c0_i32, %arg0 : i32, i32
  }
  func.func @transform_1(%arg0: i32) -> (i32, i32) {
    %c0_i32 = arith.constant 0 : i32
    %c0_i32_0 = arith.constant 0 : i32
    %c0_i32_1 = arith.constant 0 : i32
    return %c0_i32, %c0_i32_0 : i32, i32
  }
  func.func @transform_2(%arg0: i32) -> (i32, i32) {
    %c0_i32 = arith.constant 0 : i32
    %c0_i32_0 = arith.constant 0 : i32
    %c0_i32_1 = arith.constant 0 : i32
    return %c0_i32, %c0_i32_0 : i32, i32
  }
  func.func @transform_3(%arg0: i32) -> i32 {
    %c0_i32 = arith.constant 0 : i32
    %c0_i32_0 = arith.constant 0 : i32
    return %c0_i32 : i32
  }
  func.func @transform_4(%arg0: i32) -> (i32, i32) {
    %c0_i32 = arith.constant 0 : i32
    %c0_i32_0 = arith.constant 0 : i32
    return %c0_i32, %arg0 : i32, i32
  }
}

</mosaic_0001>

<llo_original>
// kernel: tpu_custom_call.1
$region0: #{tpu_custom_call.1}
  #allocation0 [shape = 'u32[]', space=smem, size = 0x4, offset = 0x4, fixed_abs, tag = 'smem constant byte address 0x4 - core index']
  #allocation1 [shape = 'u32[72,128]{1,0:T(1,128)}', space=vmem, size = 0x9000, scoped, tag = 'internal scratch']
  #allocation2 [shape = 'f32[1]{0:T(128)S(6)}', space=smem, size = 0x200, scoped, tag = 'scoped memory for tpu_custom_call.1']
  %s0 = inlined_call_operand.hbm [shape: s32[4,256], index: 0, kind: input, shape index: {}]
  %s1 = inlined_call_operand.hbm [shape: f32[16,24], index: 1, kind: input, shape index: {}]
  %s2 = inlined_call_operand.vmem [shape: f32[1,24], index: 2, kind: input, shape index: {}]
  %s3 = inlined_call_operand.<no memory space> [shape: f32[1], index: 3, kind: input, shape index: {}]
  %s4 = inlined_call_operand.hbm [shape: f32[1,256], index: 4, kind: output, shape index: {}]
  %s5 = sld [smem:[#allocation0]]
  $region34: #{tpu_custom_call.1} parent=0
    _
  %s7 = ssub.s32 1, %s5
  %s8 = scalar_select 0, %s7, %s5
  %9 = sst [smem:[#allocation2]] %s3
  $region1: #{tpu_custom_call.1} parent=0
    #allocation3 [shape = 'u8[4096]{0}', space=vmem, size = 0x1000, scoped, tag = 'input window, operand 0, single buffered']
    #allocation4 [shape = 's32[1]{0}', space=sflag, size = 0x4, scoped, tag = 'scoped memory for tpu_custom_call.1']
    #allocation5 [shape = 's32[1]{0}', space=sflag, size = 0x4, scoped, tag = 'scoped memory for tpu_custom_call.1']
    #allocation6 [shape = 'u8[8192]{0}', space=vmem, size = 0x2000, scoped, tag = 'input window, operand 1, single buffered']
    #allocation7 [shape = 's32[1]{0}', space=sflag, size = 0x4, scoped, tag = 'scoped memory for tpu_custom_call.1']
    #allocation8 [shape = 'u8[1024]{0}', space=vmem, size = 0x400, scoped, tag = 'output window, operand 0, single buffered']
    %10 = vsyncpa [#allocation4], 0
    %11 = vsyncpa [#allocation7], 0
    %12 = vsyncpa [#allocation5], 0
    // Predicated region
    $region2: #{tpu_custom_call.1} parent=1 // pred_check
      _
    $region3: #{tpu_custom_call.1} parent=1 // pred_check_branch
      %14 = sbr.rel (0) target = $region5
    $region4: #{tpu_custom_call.1} parent=1 // pred_region
      %16 = vsyncadd [#allocation4], 0
      %s18 = sshll.u32 %s0, 4
      %s19 = int_to_ptr.hbm [resolvable:$true] %s18
      %s20 = sshll.u32 [#allocation3], 4
      %s21 = int_to_ptr.vmem [resolvable:$true] %s20
      %23 = dma.hbm_to_vmem [thread:$0]  %s19, 128, %s21, [#allocation4]
    $region5: #{tpu_custom_call.1} parent=1 // pred_fallthru
      _
    // Predicated region
    $region6: #{tpu_custom_call.1} parent=1 // pred_check
      _
    $region7: #{tpu_custom_call.1} parent=1 // pred_check_branch
      %25 = sbr.rel (0) target = $region9
    $region8: #{tpu_custom_call.1} parent=1 // pred_region
      %27 = vsyncadd [#allocation7], 0
      %s28 = sshll.u32 %s1, 4
      %s29 = int_to_ptr.hbm [resolvable:$true] %s28
      %s30 = sshll.u32 [#allocation6], 4
      %s31 = int_to_ptr.vmem [resolvable:$true] %s30
      %36 = dma.hbm_to_vmem [thread:$0]  %s29, 256, %s31, [#allocation7], 128, 128, 8
    $region9: #{tpu_custom_call.1} parent=1 // pred_fallthru
      _
    // Predicated region
    $region10: #{tpu_custom_call.1} parent=1 // pred_check
      _
    $region11: #{tpu_custom_call.1} parent=1 // pred_check_branch
      %38 = sbr.rel (0) target = $region13
    $region12: #{tpu_custom_call.1} parent=1 // pred_region
      _
    $region13: #{tpu_custom_call.1} parent=1 // pred_fallthru
      _
    // Predicated region
    $region14: #{tpu_custom_call.1} parent=1 // pred_check
      _
    $region15: #{tpu_custom_call.1} parent=1 // pred_check_branch
      %40 = sbr.rel (0) target = $region17
    $region16: #{tpu_custom_call.1} parent=1 // pred_region
      _
    $region17: #{tpu_custom_call.1} parent=1 // pred_fallthru
      _
    // Predicated region
    $region18: #{tpu_custom_call.1} parent=1 // pred_check
      _
    $region19: #{tpu_custom_call.1} parent=1 // pred_check_branch
      %42 = sbr.rel (0) target = $region21
    $region20: #{tpu_custom_call.1} parent=1 // pred_region
      %44 = dma.done [#allocation4], 128
    $region21: #{tpu_custom_call.1} parent=1 // pred_fallthru
      _
    // Predicated region
    $region22: #{tpu_custom_call.1} parent=1 // pred_check
      _
    $region23: #{tpu_custom_call.1} parent=1 // pred_check_branch
      %46 = sbr.rel (0) target = $region25
    $region24: #{tpu_custom_call.1} parent=1 // pred_region
      %48 = dma.done [#allocation7], 256
    $region25: #{tpu_custom_call.1} parent=1 // pred_fallthru
      _
    %v49 = vld [vmem:[#allocation3] sm:$0xff]
    %v50 = vld [vmem:[#allocation6] sm:$0xff]
    %v51 = vld [vmem:[#allocation6 + $0x8] sm:$0xff]
    %v52 = vlaneseq
    %v53 = vshrl.u32 %v52, 7
    %v54 = vadd.s32 %v53, 8
    %v55 = vadd.s32 %v53, 16
    %v56 = vperm.slane %v49, 0
    %v57 = vperm.slane %v49, 4
    %v58 = vperm.slane %v56, 0
    %v59 = vperm.slane %v57, 0
    %vm60 = vcmp.eq.s32.totalorder %v53, %v58
    %vm61 = vcmp.eq.s32.totalorder %v53, %v59
    %vm62 = vcmp.eq.s32.totalorder %v54, %v58
    %vm63 = vcmp.eq.s32.totalorder %v54, %v59
    %vm64 = vcmp.eq.s32.totalorder %v55, %v58
    %vm65 = vcmp.eq.s32.totalorder %v55, %v59
    %v66 = vsel %vm60, 1, 0
    %v67 = vsel %vm61, 1, 0
    %v68 = vsel %vm62, 1, 0
    %v69 = vsel %vm63, 1, 0
    %v70 = vsel %vm64, 1, 0
    %v71 = vsel %vm65, 1, 0
    %v72 = vcvt.s32.f32 %v66
    %v73 = vcvt.s32.f32 %v67
    %v74 = vcvt.s32.f32 %v68
    %v75 = vcvt.s32.f32 %v69
    %v76 = vcvt.s32.f32 %v70
    %v77 = vcvt.s32.f32 %v71
    %v78 = vperm.slane %v49, 1
    %v79 = vperm.slane %v49, 5
    %v80 = vperm.slane %v78, 1
    %v81 = vperm.slane %v79, 1
    %vm82 = vcmp.eq.s32.totalorder %v53, %v80
    %vm83 = vcmp.eq.s32.totalorder %v53, %v81
    %vm84 = vcmp.eq.s32.totalorder %v54, %v80
    %vm85 = vcmp.eq.s32.totalorder %v54, %v81
    %vm86 = vcmp.eq.s32.totalorder %v55, %v80
    %vm87 = vcmp.eq.s32.totalorder %v55, %v81
    %v88 = vsel %vm82, 1, 0
    %v89 = vsel %vm83, 1, 0
    %v90 = vsel %vm84, 1, 0
    %v91 = vsel %vm85, 1, 0
    %v92 = vsel %vm86, 1, 0
    %v93 = vsel %vm87, 1, 0
    %v94 = vcvt.s32.f32 %v88
    %v95 = vcvt.s32.f32 %v89
    %v96 = vcvt.s32.f32 %v90
    %v97 = vcvt.s32.f32 %v91
    %v98 = vcvt.s32.f32 %v92
    %v99 = vcvt.s32.f32 %v93
    %v100 = vadd.f32 %v72, %v94
    %v101 = vadd.f32 %v73, %v95
    %v102 = vadd.f32 %v74, %v96
    %v103 = vadd.f32 %v75, %v97
    %v104 = vadd.f32 %v76, %v98
    %v105 = vadd.f32 %v77, %v99
    %v106 = vperm.slane %v49, 2
    %v107 = vperm.slane %v49, 6
    %v108 = vperm.slane %v106, 2
    %v109 = vperm.slane %v107, 2
    %vm110 = vcmp.eq.s32.totalorder %v53, %v108
    %vm111 = vcmp.eq.s32.totalorder %v53, %v109
    %vm112 = vcmp.eq.s32.totalorder %v54, %v108
    %vm113 = vcmp.eq.s32.totalorder %v54, %v109
    %vm114 = vcmp.eq.s32.totalorder %v55, %v108
    %vm115 = vcmp.eq.s32.totalorder %v55, %v109
    %v116 = vsel %vm110, 1, 0
    %v117 = vsel %vm111, 1, 0
    %v118 = vsel %vm112, 1, 0
    %v119 = vsel %vm113, 1, 0
    %v120 = vsel %vm114, 1, 0
    %v121 = vsel %vm115, 1, 0
    %v122 = vcvt.s32.f32 %v116
    %v123 = vcvt.s32.f32 %v117
    %v124 = vcvt.s32.f32 %v118
    %v125 = vcvt.s32.f32 %v119
    %v126 = vcvt.s32.f32 %v120
    %v127 = vcvt.s32.f32 %v121
    %v128 = vadd.f32 %v100, %v122
    %v129 = vadd.f32 %v101, %v123
    %v130 = vadd.f32 %v102, %v124
    %v131 = vadd.f32 %v103, %v125
    %v132 = vadd.f32 %v104, %v126
    %v133 = vadd.f32 %v105, %v127
    %v134 = vperm.slane %v49, 3
    %v135 = vperm.slane %v49, 7
    %v136 = vperm.slane %v134, 3
    %v137 = vperm.slane %v135, 3
    %vm138 = vcmp.eq.s32.totalorder %v53, %v136
    %vm139 = vcmp.eq.s32.totalorder %v53, %v137
    %vm140 = vcmp.eq.s32.totalorder %v54, %v136
    %vm141 = vcmp.eq.s32.totalorder %v54, %v137
    %vm142 = vcmp.eq.s32.totalorder %v55, %v136
    %vm143 = vcmp.eq.s32.totalorder %v55, %v137
    %v144 = vsel %vm138, 1, 0
    %v145 = vsel %vm139, 1, 0
    %v146 = vsel %vm140, 1, 0
    %v147 = vsel %vm141, 1, 0
    %v148 = vsel %vm142, 1, 0
    %v149 = vsel %vm143, 1, 0
    %v150 = vcvt.s32.f32 %v144
    %v151 = vcvt.s32.f32 %v145
    %v152 = vcvt.s32.f32 %v146
    %v153 = vcvt.s32.f32 %v147
    %v154 = vcvt.s32.f32 %v148
    %v155 = vcvt.s32.f32 %v149
    %v156 = vadd.f32 %v128, %v150
    %v157 = vadd.f32 %v129, %v151
    %v158 = vadd.f32 %v130, %v152
    %v159 = vadd.f32 %v131, %v153
    %v160 = vadd.f32 %v132, %v154
    %v161 = vadd.f32 %v133, %v155
    %vm162 = vcmask 195584
    %v164 = vsel %vm162, %v50, 0
    %v167 = vsel %vm162, %v51, 0
    %169 = vmatpush.msra.mxu0 0.0
    %170 = vmatpush.msra.mxu0 0.0
    %171 = vmatpush.msra.mxu0 0.0
    %172 = vmatpush.msra.mxu0 0.0
    %173 = vmatpush.msra.mxu0 0.0
    %174 = vmatpush.msra.mxu0 0.0
    %175 = vmatpush.msra.mxu0 0.0
    %176 = vmatpush.msra.mxu0 0.0
    %177 = vmatpush.msra.mxu0 0.0
    %178 = vmatpush.msra.mxu0 0.0
    %179 = vmatpush.msra.mxu0 0.0
    %180 = vmatpush.msra.mxu0 0.0
    %181 = vmatpush.msra.mxu0 0.0
    %v182 = vand.u32 %v160, 4294901760
    %183 = vmatpush.msra.mxu0 %v182
    %v184 = vand.u32 %v158, 4294901760
    %185 = vmatpush.msra.mxu0 %v184
    %v186 = vand.u32 %v156, 4294901760
    %187 = vmatpush.msra.mxu0 %v186
    %v188 = vand.u32 %v164, 4294901760
    %v189 = vsub.f32 %v164, %v188
    %v190 = vand.u32 %v189, 4294901760
    %v191 = vsub.f32 %v189, %v190
    %v192 = vand.u32 %v191, 4294901760
    %193 = vmatmul.f32.gmra.mxu0 %v192
    %v194 = vpop.f32.mrf.mxu0
    %v195 = vadd.f32 0.0, %v194
    %v196 = vand.u32 %v167, 4294901760
    %v197 = vsub.f32 %v167, %v196
    %v198 = vand.u32 %v197, 4294901760
    %v199 = vsub.f32 %v197, %v198
    %v200 = vand.u32 %v199, 4294901760
    %201 = vmatmul.f32.gmra.mxu0 %v200
    %v202 = vpop.f32.mrf.mxu0
    %v203 = vadd.f32 0.0, %v202
    %204 = vdwg.mxu0
    %205 = vmatpush.msra.mxu0 0.0
    %206 = vmatpush.msra.mxu0 0.0
    %207 = vmatpush.msra.mxu0 0.0
    %208 = vmatpush.msra.mxu0 0.0
    %209 = vmatpush.msra.mxu0 0.0
    %210 = vmatpush.msra.mxu0 0.0
    %211 = vmatpush.msra.mxu0 0.0
    %212 = vmatpush.msra.mxu0 0.0
    %213 = vmatpush.msra.mxu0 0.0
    %214 = vmatpush.msra.mxu0 0.0
    %215 = vmatpush.msra.mxu0 0.0
    %216 = vmatpush.msra.mxu0 0.0
    %217 = vmatpush.msra.mxu0 0.0
    %v218 = vand.u32 %v160, 4294901760
    %v219 = vsub.f32 %v160, %v218
    %v220 = vand.u32 %v219, 4294901760
    %v221 = vsub.f32 %v219, %v220
    %v222 = vand.u32 %v221, 4294901760
    %223 = vmatpush.msra.mxu0 %v222
    %v224 = vand.u32 %v158, 4294901760
    %v225 = vsub.f32 %v158, %v224
    %v226 = vand.u32 %v225, 4294901760
    %v227 = vsub.f32 %v225, %v226
    %v228 = vand.u32 %v227, 4294901760
    %229 = vmatpush.msra.mxu0 %v228
    %v230 = vand.u32 %v156, 4294901760
    %v231 = vsub.f32 %v156, %v230
    %v232 = vand.u32 %v231, 4294901760
    %v233 = vsub.f32 %v231, %v232
    %v234 = vand.u32 %v233, 4294901760
    %235 = vmatpush.msra.mxu0 %v234
    %v236 = vand.u32 %v164, 4294901760
    %237 = vmatmul.f32.gmra.mxu0 %v236
    %v238 = vpop.f32.mrf.mxu0
    %v239 = vadd.f32 %v195, %v238
    %v240 = vand.u32 %v167, 4294901760
    %241 = vmatmul.f32.gmra.mxu0 %v240
    %v242 = vpop.f32.mrf.mxu0
    %v243 = vadd.f32 %v203, %v242
    %244 = vdwg.mxu0
    %245 = vmatpush.msra.mxu0 0.0
    %246 = vmatpush.msra.mxu0 0.0
    %247 = vmatpush.msra.mxu0 0.0
    %248 = vmatpush.msra.mxu0 0.0
    %249 = vmatpush.msra.mxu0 0.0
    %250 = vmatpush.msra.mxu0 0.0
    %251 = vmatpush.msra.mxu0 0.0
    %252 = vmatpush.msra.mxu0 0.0
    %253 = vmatpush.msra.mxu0 0.0
    %254 = vmatpush.msra.mxu0 0.0
    %255 = vmatpush.msra.mxu0 0.0
    %256 = vmatpush.msra.mxu0 0.0
    %257 = vmatpush.msra.mxu0 0.0
    %v258 = vand.u32 %v160, 4294901760
    %v259 = vsub.f32 %v160, %v258
    %260 = vmatpush.msra.mxu0 %v259
    %v261 = vand.u32 %v158, 4294901760
    %v262 = vsub.f32 %v158, %v261
    %263 = vmatpush.msra.mxu0 %v262
    %v264 = vand.u32 %v156, 4294901760
    %v265 = vsub.f32 %v156, %v264
    %266 = vmatpush.msra.mxu0 %v265
    %v267 = vand.u32 %v164, 4294901760
    %v268 = vsub.f32 %v164, %v267
    %269 = vmatmul.f32.gmra.mxu0 %v268
    %v270 = vpop.f32.mrf.mxu0
    %v271 = vadd.f32 %v239, %v270
    %v272 = vand.u32 %v167, 4294901760
    %v273 = vsub.f32 %v167, %v272
    %274 = vmatmul.f32.gmra.mxu0 %v273
    %v275 = vpop.f32.mrf.mxu0
    %v276 = vadd.f32 %v243, %v275
    %277 = vdwg.mxu0
    %278 = vmatpush.msra.mxu0 0.0
    %279 = vmatpush.msra.mxu0 0.0
    %280 = vmatpush.msra.mxu0 0.0
    %281 = vmatpush.msra.mxu0 0.0
    %282 = vmatpush.msra.mxu0 0.0
    %283 = vmatpush.msra.mxu0 0.0
    %284 = vmatpush.msra.mxu0 0.0
    %285 = vmatpush.msra.mxu0 0.0
    %286 = vmatpush.msra.mxu0 0.0
    %287 = vmatpush.msra.mxu0 0.0
    %288 = vmatpush.msra.mxu0 0.0
    %289 = vmatpush.msra.mxu0 0.0
    %290 = vmatpush.msra.mxu0 0.0
    %v291 = vand.u32 %v160, 4294901760
    %292 = vmatpush.msra.mxu0 %v291
    %v293 = vand.u32 %v158, 4294901760
    %294 = vmatpush.msra.mxu0 %v293
    %v295 = vand.u32 %v156, 4294901760
    %296 = vmatpush.msra.mxu0 %v295
    %v297 = vand.u32 %v164, 4294901760
    %v298 = vsub.f32 %v164, %v297
    %v299 = vand.u32 %v298, 4294901760
    %300 = vmatmul.f32.gmra.mxu0 %v299
    %v301 = vpop.f32.mrf.mxu0
    %v302 = vadd.f32 %v271, %v301
    %v303 = vand.u32 %v167, 4294901760
    %v304 = vsub.f32 %v167, %v303
    %v305 = vand.u32 %v304, 4294901760
    %306 = vmatmul.f32.gmra.mxu0 %v305
    %v307 = vpop.f32.mrf.mxu0
    %v308 = vadd.f32 %v276, %v307
    %309 = vdwg.mxu0
    %310 = vmatpush.msra.mxu0 0.0
    %311 = vmatpush.msra.mxu0 0.0
    %312 = vmatpush.msra.mxu0 0.0
    %313 = vmatpush.msra.mxu0 0.0
    %314 = vmatpush.msra.mxu0 0.0
    %315 = vmatpush.msra.mxu0 0.0
    %316 = vmatpush.msra.mxu0 0.0
    %317 = vmatpush.msra.mxu0 0.0
    %318 = vmatpush.msra.mxu0 0.0
    %319 = vmatpush.msra.mxu0 0.0
    %320 = vmatpush.msra.mxu0 0.0
    %321 = vmatpush.msra.mxu0 0.0
    %322 = vmatpush.msra.mxu0 0.0
    %v323 = vand.u32 %v160, 4294901760
    %v324 = vsub.f32 %v160, %v323
    %v325 = vand.u32 %v324, 4294901760
    %326 = vmatpush.msra.mxu0 %v325
    %v327 = vand.u32 %v158, 4294901760
    %v328 = vsub.f32 %v158, %v327
    %v329 = vand.u32 %v328, 4294901760
    %330 = vmatpush.msra.mxu0 %v329
    %v331 = vand.u32 %v156, 4294901760
    %v332 = vsub.f32 %v156, %v331
    %v333 = vand.u32 %v332, 4294901760
    %334 = vmatpush.msra.mxu0 %v333
    %v335 = vand.u32 %v164, 4294901760
    %336 = vmatmul.f32.gmra.mxu0 %v335
    %v337 = vpop.f32.mrf.mxu0
    %v338 = vadd.f32 %v302, %v337
    %v339 = vand.u32 %v167, 4294901760
    %340 = vmatmul.f32.gmra.mxu0 %v339
    %v341 = vpop.f32.mrf.mxu0
    %v342 = vadd.f32 %v308, %v341
    %343 = vdwg.mxu0
    %344 = vmatpush.msra.mxu0 0.0
    %345 = vmatpush.msra.mxu0 0.0
    %346 = vmatpush.msra.mxu0 0.0
    %347 = vmatpush.msra.mxu0 0.0
    %348 = vmatpush.msra.mxu0 0.0
    %349 = vmatpush.msra.mxu0 0.0
    %350 = vmatpush.msra.mxu0 0.0
    %351 = vmatpush.msra.mxu0 0.0
    %352 = vmatpush.msra.mxu0 0.0
    %353 = vmatpush.msra.mxu0 0.0
    %354 = vmatpush.msra.mxu0 0.0
    %355 = vmatpush.msra.mxu0 0.0
    %356 = vmatpush.msra.mxu0 0.0
    %v357 = vand.u32 %v160, 4294901760
    %358 = vmatpush.msra.mxu0 %v357
    %v359 = vand.u32 %v158, 4294901760
    %360 = vmatpush.msra.mxu0 %v359
    %v361 = vand.u32 %v156, 4294901760
    %362 = vmatpush.msra.mxu0 %v361
    %v363 = vand.u32 %v164, 4294901760
    %364 = vmatmul.f32.gmra.mxu0 %v363
    %v365 = vpop.f32.mrf.mxu0
    %v366 = vadd.f32 %v338, %v365
    %v367 = vand.u32 %v167, 4294901760
    %368 = vmatmul.f32.gmra.mxu0 %v367
    %v369 = vpop.f32.mrf.mxu0
    %v370 = vadd.f32 %v342, %v369
    %371 = vdwg.mxu0
    %372 = vmatpush.msra.mxu0 0.0
    %373 = vmatpush.msra.mxu0 0.0
    %374 = vmatpush.msra.mxu0 0.0
    %375 = vmatpush.msra.mxu0 0.0
    %376 = vmatpush.msra.mxu0 0.0
    %377 = vmatpush.msra.mxu0 0.0
    %378 = vmatpush.msra.mxu0 0.0
    %379 = vmatpush.msra.mxu0 0.0
    %380 = vmatpush.msra.mxu0 0.0
    %381 = vmatpush.msra.mxu0 0.0
    %382 = vmatpush.msra.mxu0 0.0
    %383 = vmatpush.msra.mxu0 0.0
    %384 = vmatpush.msra.mxu0 0.0
    %v385 = vand.u32 %v161, 4294901760
    %386 = vmatpush.msra.mxu0 %v385
    %v387 = vand.u32 %v159, 4294901760
    %388 = vmatpush.msra.mxu0 %v387
    %v389 = vand.u32 %v157, 4294901760
    %390 = vmatpush.msra.mxu0 %v389
    %v391 = vand.u32 %v164, 4294901760
    %v392 = vsub.f32 %v164, %v391
    %v393 = vand.u32 %v392, 4294901760
    %v394 = vsub.f32 %v392, %v393
    %v395 = vand.u32 %v394, 4294901760
    %396 = vmatmul.f32.gmra.mxu0 %v395
    %v397 = vpop.f32.mrf.mxu0
    %v398 = vadd.f32 0.0, %v397
    %v399 = vand.u32 %v167, 4294901760
    %v400 = vsub.f32 %v167, %v399
    %v401 = vand.u32 %v400, 4294901760
    %v402 = vsub.f32 %v400, %v401
    %v403 = vand.u32 %v402, 4294901760
    %404 = vmatmul.f32.gmra.mxu0 %v403
    %v405 = vpop.f32.mrf.mxu0
    %v406 = vadd.f32 0.0, %v405
    %407 = vdwg.mxu0
    %408 = vmatpush.msra.mxu0 0.0
    %409 = vmatpush.msra.mxu0 0.0
    %410 = vmatpush.msra.mxu0 0.0
    %411 = vmatpush.msra.mxu0 0.0
    %412 = vmatpush.msra.mxu0 0.0
    %413 = vmatpush.msra.mxu0 0.0
    %414 = vmatpush.msra.mxu0 0.0
    %415 = vmatpush.msra.mxu0 0.0
    %416 = vmatpush.msra.mxu0 0.0
    %417 = vmatpush.msra.mxu0 0.0
    %418 = vmatpush.msra.mxu0 0.0
    %419 = vmatpush.msra.mxu0 0.0
    %420 = vmatpush.msra.mxu0 0.0
    %v421 = vand.u32 %v161, 4294901760
    %v422 = vsub.f32 %v161, %v421
    %v423 = vand.u32 %v422, 4294901760
    %v424 = vsub.f32 %v422, %v423
    %v425 = vand.u32 %v424, 4294901760
    %426 = vmatpush.msra.mxu0 %v425
    %v427 = vand.u32 %v159, 4294901760
    %v428 = vsub.f32 %v159, %v427
    %v429 = vand.u32 %v428, 4294901760
    %v430 = vsub.f32 %v428, %v429
    %v431 = vand.u32 %v430, 4294901760
    %432 = vmatpush.msra.mxu0 %v431
    %v433 = vand.u32 %v157, 4294901760
    %v434 = vsub.f32 %v157, %v433
    %v435 = vand.u32 %v434, 4294901760
    %v436 = vsub.f32 %v434, %v435
    %v437 = vand.u32 %v436, 4294901760
    %438 = vmatpush.msra.mxu0 %v437
    %v439 = vand.u32 %v164, 4294901760
    %440 = vmatmul.f32.gmra.mxu0 %v439
    %v441 = vpop.f32.mrf.mxu0
    %v442 = vadd.f32 %v398, %v441
    %v443 = vand.u32 %v167, 4294901760
    %444 = vmatmul.f32.gmra.mxu0 %v443
    %v445 = vpop.f32.mrf.mxu0
    %v446 = vadd.f32 %v406, %v445
    %447 = vdwg.mxu0
    %448 = vmatpush.msra.mxu0 0.0
    %449 = vmatpush.msra.mxu0 0.0
    %450 = vmatpush.msra.mxu0 0.0
    %451 = vmatpush.msra.mxu0 0.0
    %452 = vmatpush.msra.mxu0 0.0
    %453 = vmatpush.msra.mxu0 0.0
    %454 = vmatpush.msra.mxu0 0.0
    %455 = vmatpush.msra.mxu0 0.0
    %456 = vmatpush.msra.mxu0 0.0
    %457 = vmatpush.msra.mxu0 0.0
    %458 = vmatpush.msra.mxu0 0.0
    %459 = vmatpush.msra.mxu0 0.0
    %460 = vmatpush.msra.mxu0 0.0
    %v461 = vand.u32 %v161, 4294901760
    %v462 = vsub.f32 %v161, %v461
    %463 = vmatpush.msra.mxu0 %v462
    %v464 = vand.u32 %v159, 4294901760
    %v465 = vsub.f32 %v159, %v464
    %466 = vmatpush.msra.mxu0 %v465
    %v467 = vand.u32 %v157, 4294901760
    %v468 = vsub.f32 %v157, %v467
    %469 = vmatpush.msra.mxu0 %v468
    %v470 = vand.u32 %v164, 4294901760
    %v471 = vsub.f32 %v164, %v470
    %472 = vmatmul.f32.gmra.mxu0 %v471
    %v473 = vpop.f32.mrf.mxu0
    %v474 = vadd.f32 %v442, %v473
    %v475 = vand.u32 %v167, 4294901760
    %v476 = vsub.f32 %v167, %v475
    %477 = vmatmul.f32.gmra.mxu0 %v476
    %v478 = vpop.f32.mrf.mxu0
    %v479 = vadd.f32 %v446, %v478
    %480 = vdwg.mxu0
    %481 = vmatpush.msra.mxu0 0.0
    %482 = vmatpush.msra.mxu0 0.0
    %483 = vmatpush.msra.mxu0 0.0
    %484 = vmatpush.msra.mxu0 0.0
    %485 = vmatpush.msra.mxu0 0.0
    %486 = vmatpush.msra.mxu0 0.0
    %487 = vmatpush.msra.mxu0 0.0
    %488 = vmatpush.msra.mxu0 0.0
    %489 = vmatpush.msra.mxu0 0.0
    %490 = vmatpush.msra.mxu0 0.0
    %491 = vmatpush.msra.mxu0 0.0
    %492 = vmatpush.msra.mxu0 0.0
    %493 = vmatpush.msra.mxu0 0.0
    %v494 = vand.u32 %v161, 4294901760
    %495 = vmatpush.msra.mxu0 %v494
    %v496 = vand.u32 %v159, 4294901760
    %497 = vmatpush.msra.mxu0 %v496
    %v498 = vand.u32 %v157, 4294901760
    %499 = vmatpush.msra.mxu0 %v498
    %v500 = vand.u32 %v164, 4294901760
    %v501 = vsub.f32 %v164, %v500
    %v502 = vand.u32 %v501, 4294901760
    %503 = vmatmul.f32.gmra.mxu0 %v502
    %v504 = vpop.f32.mrf.mxu0
    %v505 = vadd.f32 %v474, %v504
    %v506 = vand.u32 %v167, 4294901760
    %v507 = vsub.f32 %v167, %v506
    %v508 = vand.u32 %v507, 4294901760
    %509 = vmatmul.f32.gmra.mxu0 %v508
    %v510 = vpop.f32.mrf.mxu0
    %v511 = vadd.f32 %v479, %v510
    %512 = vdwg.mxu0
    %513 = vmatpush.msra.mxu0 0.0
    %514 = vmatpush.msra.mxu0 0.0
    %515 = vmatpush.msra.mxu0 0.0
    %516 = vmatpush.msra.mxu0 0.0
    %517 = vmatpush.msra.mxu0 0.0
    %518 = vmatpush.msra.mxu0 0.0
    %519 = vmatpush.msra.mxu0 0.0
    %520 = vmatpush.msra.mxu0 0.0
    %521 = vmatpush.msra.mxu0 0.0
    %522 = vmatpush.msra.mxu0 0.0
    %523 = vmatpush.msra.mxu0 0.0
    %524 = vmatpush.msra.mxu0 0.0
    %525 = vmatpush.msra.mxu0 0.0
    %v526 = vand.u32 %v161, 4294901760
    %v527 = vsub.f32 %v161, %v526
    %v528 = vand.u32 %v527, 4294901760
    %529 = vmatpush.msra.mxu0 %v528
    %v530 = vand.u32 %v159, 4294901760
    %v531 = vsub.f32 %v159, %v530
    %v532 = vand.u32 %v531, 4294901760
    %533 = vmatpush.msra.mxu0 %v532
    %v534 = vand.u32 %v157, 4294901760
    %v535 = vsub.f32 %v157, %v534
    %v536 = vand.u32 %v535, 4294901760
    %537 = vmatpush.msra.mxu0 %v536
    %v538 = vand.u32 %v164, 4294901760
    %539 = vmatmul.f32.gmra.mxu0 %v538
    %v540 = vpop.f32.mrf.mxu0
    %v541 = vadd.f32 %v505, %v540
    %v542 = vand.u32 %v167, 4294901760
    %543 = vmatmul.f32.gmra.mxu0 %v542
    %v544 = vpop.f32.mrf.mxu0
    %v545 = vadd.f32 %v511, %v544
    %546 = vdwg.mxu0
    %547 = vmatpush.msra.mxu0 0.0
    %548 = vmatpush.msra.mxu0 0.0
    %549 = vmatpush.msra.mxu0 0.0
    %550 = vmatpush.msra.mxu0 0.0
    %551 = vmatpush.msra.mxu0 0.0
    %552 = vmatpush.msra.mxu0 0.0
    %553 = vmatpush.msra.mxu0 0.0
    %554 = vmatpush.msra.mxu0 0.0
    %555 = vmatpush.msra.mxu0 0.0
    %556 = vmatpush.msra.mxu0 0.0
    %557 = vmatpush.msra.mxu0 0.0
    %558 = vmatpush.msra.mxu0 0.0
    %559 = vmatpush.msra.mxu0 0.0
    %v560 = vand.u32 %v161, 4294901760
    %561 = vmatpush.msra.mxu0 %v560
    %v562 = vand.u32 %v159, 4294901760
    %563 = vmatpush.msra.mxu0 %v562
    %v564 = vand.u32 %v157, 4294901760
    %565 = vmatpush.msra.mxu0 %v564
    %v566 = vand.u32 %v164, 4294901760
    %567 = vmatmul.f32.gmra.mxu0 %v566
    %v568 = vpop.f32.mrf.mxu0
    %v569 = vadd.f32 %v541, %v568
    %v570 = vand.u32 %v167, 4294901760
    %571 = vmatmul.f32.gmra.mxu0 %v570
    %v572 = vpop.f32.mrf.mxu0
    %v573 = vadd.f32 %v545, %v572
    %574 = vdwg.mxu0
    %v575 = vmul.f32 %v50, %v50
    %v576 = vmul.f32 %v51, %v51
    %v578 = vsel %vm162, %v575, 0
    %v581 = vsel %vm162, %v576, 0
    %583 = vmatpush.msra.mxu0 0.0
    %584 = vmatpush.msra.mxu0 0.0
    %585 = vmatpush.msra.mxu0 0.0
    %586 = vmatpush.msra.mxu0 0.0
    %587 = vmatpush.msra.mxu0 0.0
    %588 = vmatpush.msra.mxu0 0.0
    %589 = vmatpush.msra.mxu0 0.0
    %590 = vmatpush.msra.mxu0 0.0
    %591 = vmatpush.msra.mxu0 0.0
    %592 = vmatpush.msra.mxu0 0.0
    %593 = vmatpush.msra.mxu0 0.0
    %594 = vmatpush.msra.mxu0 0.0
    %595 = vmatpush.msra.mxu0 0.0
    %v596 = vand.u32 %v160, 4294901760
    %597 = vmatpush.msra.mxu0 %v596
    %v598 = vand.u32 %v158, 4294901760
    %599 = vmatpush.msra.mxu0 %v598
    %v600 = vand.u32 %v156, 4294901760
    %601 = vmatpush.msra.mxu0 %v600
    %v602 = vand.u32 %v578, 4294901760
    %v603 = vsub.f32 %v578, %v602
    %v604 = vand.u32 %v603, 4294901760
    %v605 = vsub.f32 %v603, %v604
    %v606 = vand.u32 %v605, 4294901760
    %607 = vmatmul.f32.gmra.mxu0 %v606
    %v608 = vpop.f32.mrf.mxu0
    %v609 = vadd.f32 0.0, %v608
    %v610 = vand.u32 %v581, 4294901760
    %v611 = vsub.f32 %v581, %v610
    %v612 = vand.u32 %v611, 4294901760
    %v613 = vsub.f32 %v611, %v612
    %v614 = vand.u32 %v613, 4294901760
    %615 = vmatmul.f32.gmra.mxu0 %v614
    %v616 = vpop.f32.mrf.mxu0
    %v617 = vadd.f32 0.0, %v616
    %618 = vdwg.mxu0
    %619 = vmatpush.msra.mxu0 0.0
    %620 = vmatpush.msra.mxu0 0.0
    %621 = vmatpush.msra.mxu0 0.0
    %622 = vmatpush.msra.mxu0 0.0
    %623 = vmatpush.msra.mxu0 0.0
    %624 = vmatpush.msra.mxu0 0.0
    %625 = vmatpush.msra.mxu0 0.0
    %626 = vmatpush.msra.mxu0 0.0
    %627 = vmatpush.msra.mxu0 0.0
    %628 = vmatpush.msra.mxu0 0.0
    %629 = vmatpush.msra.mxu0 0.0
    %630 = vmatpush.msra.mxu0 0.0
    %631 = vmatpush.msra.mxu0 0.0
    %v632 = vand.u32 %v160, 4294901760
    %v633 = vsub.f32 %v160, %v632
    %v634 = vand.u32 %v633, 4294901760
    %v635 = vsub.f32 %v633, %v634
    %v636 = vand.u32 %v635, 4294901760
    %637 = vmatpush.msra.mxu0 %v636
    %v638 = vand.u32 %v158, 4294901760
    %v639 = vsub.f32 %v158, %v638
    %v640 = vand.u32 %v639, 4294901760
    %v641 = vsub.f32 %v639, %v640
    %v642 = vand.u32 %v641, 4294901760
    %643 = vmatpush.msra.mxu0 %v642
    %v644 = vand.u32 %v156, 4294901760
    %v645 = vsub.f32 %v156, %v644
    %v646 = vand.u32 %v645, 4294901760
    %v647 = vsub.f32 %v645, %v646
    %v648 = vand.u32 %v647, 4294901760
    %649 = vmatpush.msra.mxu0 %v648
    %v650 = vand.u32 %v578, 4294901760
    %651 = vmatmul.f32.gmra.mxu0 %v650
    %v652 = vpop.f32.mrf.mxu0
    %v653 = vadd.f32 %v609, %v652
    %v654 = vand.u32 %v581, 4294901760
    %655 = vmatmul.f32.gmra.mxu0 %v654
    %v656 = vpop.f32.mrf.mxu0
    %v657 = vadd.f32 %v617, %v656
    %658 = vdwg.mxu0
    %659 = vmatpush.msra.mxu0 0.0
    %660 = vmatpush.msra.mxu0 0.0
    %661 = vmatpush.msra.mxu0 0.0
    %662 = vmatpush.msra.mxu0 0.0
    %663 = vmatpush.msra.mxu0 0.0
    %664 = vmatpush.msra.mxu0 0.0
    %665 = vmatpush.msra.mxu0 0.0
    %666 = vmatpush.msra.mxu0 0.0
    %667 = vmatpush.msra.mxu0 0.0
    %668 = vmatpush.msra.mxu0 0.0
    %669 = vmatpush.msra.mxu0 0.0
    %670 = vmatpush.msra.mxu0 0.0
    %671 = vmatpush.msra.mxu0 0.0
    %v672 = vand.u32 %v160, 4294901760
    %v673 = vsub.f32 %v160, %v672
    %674 = vmatpush.msra.mxu0 %v673
    %v675 = vand.u32 %v158, 4294901760
    %v676 = vsub.f32 %v158, %v675
    %677 = vmatpush.msra.mxu0 %v676
    %v678 = vand.u32 %v156, 4294901760
    %v679 = vsub.f32 %v156, %v678
    %680 = vmatpush.msra.mxu0 %v679
    %v681 = vand.u32 %v578, 4294901760
    %v682 = vsub.f32 %v578, %v681
    %683 = vmatmul.f32.gmra.mxu0 %v682
    %v684 = vpop.f32.mrf.mxu0
    %v685 = vadd.f32 %v653, %v684
    %v686 = vand.u32 %v581, 4294901760
    %v687 = vsub.f32 %v581, %v686
    %688 = vmatmul.f32.gmra.mxu0 %v687
    %v689 = vpop.f32.mrf.mxu0
    %v690 = vadd.f32 %v657, %v689
    %691 = vdwg.mxu0
    %692 = vmatpush.msra.mxu0 0.0
    %693 = vmatpush.msra.mxu0 0.0
    %694 = vmatpush.msra.mxu0 0.0
    %695 = vmatpush.msra.mxu0 0.0
    %696 = vmatpush.msra.mxu0 0.0
    %697 = vmatpush.msra.mxu0 0.0
    %698 = vmatpush.msra.mxu0 0.0
    %699 = vmatpush.msra.mxu0 0.0
    %700 = vmatpush.msra.mxu0 0.0
    %701 = vmatpush.msra.mxu0 0.0
    %702 = vmatpush.msra.mxu0 0.0
    %703 = vmatpush.msra.mxu0 0.0
    %704 = vmatpush.msra.mxu0 0.0
    %v705 = vand.u32 %v160, 4294901760
    %706 = vmatpush.msra.mxu0 %v705
    %v707 = vand.u32 %v158, 4294901760
    %708 = vmatpush.msra.mxu0 %v707
    %v709 = vand.u32 %v156, 4294901760
    %710 = vmatpush.msra.mxu0 %v709
    %v711 = vand.u32 %v578, 4294901760
    %v712 = vsub.f32 %v578, %v711
    %v713 = vand.u32 %v712, 4294901760
    %714 = vmatmul.f32.gmra.mxu0 %v713
    %v715 = vpop.f32.mrf.mxu0
    %v716 = vadd.f32 %v685, %v715
    %v717 = vand.u32 %v581, 4294901760
    %v718 = vsub.f32 %v581, %v717
    %v719 = vand.u32 %v718, 4294901760
    %720 = vmatmul.f32.gmra.mxu0 %v719
    %v721 = vpop.f32.mrf.mxu0
    %v722 = vadd.f32 %v690, %v721
    %723 = vdwg.mxu0
    %724 = vmatpush.msra.mxu0 0.0
    %725 = vmatpush.msra.mxu0 0.0
    %726 = vmatpush.msra.mxu0 0.0
    %727 = vmatpush.msra.mxu0 0.0
    %728 = vmatpush.msra.mxu0 0.0
    %729 = vmatpush.msra.mxu0 0.0
    %730 = vmatpush.msra.mxu0 0.0
    %731 = vmatpush.msra.mxu0 0.0
    %732 = vmatpush.msra.mxu0 0.0
    %733 = vmatpush.msra.mxu0 0.0
    %734 = vmatpush.msra.mxu0 0.0
    %735 = vmatpush.msra.mxu0 0.0
    %736 = vmatpush.msra.mxu0 0.0
    %v737 = vand.u32 %v160, 4294901760
    %v738 = vsub.f32 %v160, %v737
    %v739 = vand.u32 %v738, 4294901760
    %740 = vmatpush.msra.mxu0 %v739
    %v741 = vand.u32 %v158, 4294901760
    %v742 = vsub.f32 %v158, %v741
    %v743 = vand.u32 %v742, 4294901760
    %744 = vmatpush.msra.mxu0 %v743
    %v745 = vand.u32 %v156, 4294901760
    %v746 = vsub.f32 %v156, %v745
    %v747 = vand.u32 %v746, 4294901760
    %748 = vmatpush.msra.mxu0 %v747
    %v749 = vand.u32 %v578, 4294901760
    %750 = vmatmul.f32.gmra.mxu0 %v749
    %v751 = vpop.f32.mrf.mxu0
    %v752 = vadd.f32 %v716, %v751
    %v753 = vand.u32 %v581, 4294901760
    %754 = vmatmul.f32.gmra.mxu0 %v753
    %v755 = vpop.f32.mrf.mxu0
    %v756 = vadd.f32 %v722, %v755
    %757 = vdwg.mxu0
    %758 = vmatpush.msra.mxu0 0.0
    %759 = vmatpush.msra.mxu0 0.0
    %760 = vmatpush.msra.mxu0 0.0
    %761 = vmatpush.msra.mxu0 0.0
    %762 = vmatpush.msra.mxu0 0.0
    %763 = vmatpush.msra.mxu0 0.0
    %764 = vmatpush.msra.mxu0 0.0
    %765 = vmatpush.msra.mxu0 0.0
    %766 = vmatpush.msra.mxu0 0.0
    %767 = vmatpush.msra.mxu0 0.0
    %768 = vmatpush.msra.mxu0 0.0
    %769 = vmatpush.msra.mxu0 0.0
    %770 = vmatpush.msra.mxu0 0.0
    %v771 = vand.u32 %v160, 4294901760
    %772 = vmatpush.msra.mxu0 %v771
    %v773 = vand.u32 %v158, 4294901760
    %774 = vmatpush.msra.mxu0 %v773
    %v775 = vand.u32 %v156, 4294901760
    %776 = vmatpush.msra.mxu0 %v775
    %v777 = vand.u32 %v578, 4294901760
    %778 = vmatmul.f32.gmra.mxu0 %v777
    %v779 = vpop.f32.mrf.mxu0
    %v780 = vadd.f32 %v752, %v779
    %v781 = vand.u32 %v581, 4294901760
    %782 = vmatmul.f32.gmra.mxu0 %v781
    %v783 = vpop.f32.mrf.mxu0
    %v784 = vadd.f32 %v756, %v783
    %785 = vdwg.mxu0
    %786 = vmatpush.msra.mxu0 0.0
    %787 = vmatpush.msra.mxu0 0.0
    %788 = vmatpush.msra.mxu0 0.0
    %789 = vmatpush.msra.mxu0 0.0
    %790 = vmatpush.msra.mxu0 0.0
    %791 = vmatpush.msra.mxu0 0.0
    %792 = vmatpush.msra.mxu0 0.0
    %793 = vmatpush.msra.mxu0 0.0
    %794 = vmatpush.msra.mxu0 0.0
    %795 = vmatpush.msra.mxu0 0.0
    %796 = vmatpush.msra.mxu0 0.0
    %797 = vmatpush.msra.mxu0 0.0
    %798 = vmatpush.msra.mxu0 0.0
    %v799 = vand.u32 %v161, 4294901760
    %800 = vmatpush.msra.mxu0 %v799
    %v801 = vand.u32 %v159, 4294901760
    %802 = vmatpush.msra.mxu0 %v801
    %v803 = vand.u32 %v157, 4294901760
    %804 = vmatpush.msra.mxu0 %v803
    %v805 = vand.u32 %v578, 4294901760
    %v806 = vsub.f32 %v578, %v805
    %v807 = vand.u32 %v806, 4294901760
    %v808 = vsub.f32 %v806, %v807
    %v809 = vand.u32 %v808, 4294901760
    %810 = vmatmul.f32.gmra.mxu0 %v809
    %v811 = vpop.f32.mrf.mxu0
    %v812 = vadd.f32 0.0, %v811
    %v813 = vand.u32 %v581, 4294901760
    %v814 = vsub.f32 %v581, %v813
    %v815 = vand.u32 %v814, 4294901760
    %v816 = vsub.f32 %v814, %v815
    %v817 = vand.u32 %v816, 4294901760
    %818 = vmatmul.f32.gmra.mxu0 %v817
    %v819 = vpop.f32.mrf.mxu0
    %v820 = vadd.f32 0.0, %v819
    %821 = vdwg.mxu0
    %822 = vmatpush.msra.mxu0 0.0
    %823 = vmatpush.msra.mxu0 0.0
    %824 = vmatpush.msra.mxu0 0.0
    %825 = vmatpush.msra.mxu0 0.0
    %826 = vmatpush.msra.mxu0 0.0
    %827 = vmatpush.msra.mxu0 0.0
    %828 = vmatpush.msra.mxu0 0.0
    %829 = vmatpush.msra.mxu0 0.0
    %830 = vmatpush.msra.mxu0 0.0
    %831 = vmatpush.msra.mxu0 0.0
    %832 = vmatpush.msra.mxu0 0.0
    %833 = vmatpush.msra.mxu0 0.0
    %834 = vmatpush.msra.mxu0 0.0
    %v835 = vand.u32 %v161, 4294901760
    %v836 = vsub.f32 %v161, %v835
    %v837 = vand.u32 %v836, 4294901760
    %v838 = vsub.f32 %v836, %v837
    %v839 = vand.u32 %v838, 4294901760
    %840 = vmatpush.msra.mxu0 %v839
    %v841 = vand.u32 %v159, 4294901760
    %v842 = vsub.f32 %v159, %v841
    %v843 = vand.u32 %v842, 4294901760
    %v844 = vsub.f32 %v842, %v843
    %v845 = vand.u32 %v844, 4294901760
    %846 = vmatpush.msra.mxu0 %v845
    %v847 = vand.u32 %v157, 4294901760
    %v848 = vsub.f32 %v157, %v847
    %v849 = vand.u32 %v848, 4294901760
    %v850 = vsub.f32 %v848, %v849
    %v851 = vand.u32 %v850, 4294901760
    %852 = vmatpush.msra.mxu0 %v851
    %v853 = vand.u32 %v578, 4294901760
    %854 = vmatmul.f32.gmra.mxu0 %v853
    %v855 = vpop.f32.mrf.mxu0
    %v856 = vadd.f32 %v812, %v855
    %v857 = vand.u32 %v581, 4294901760
    %858 = vmatmul.f32.gmra.mxu0 %v857
    %v859 = vpop.f32.mrf.mxu0
    %v860 = vadd.f32 %v820, %v859
    %861 = vdwg.mxu0
    %862 = vmatpush.msra.mxu0 0.0
    %863 = vmatpush.msra.mxu0 0.0
    %864 = vmatpush.msra.mxu0 0.0
    %865 = vmatpush.msra.mxu0 0.0
    %866 = vmatpush.msra.mxu0 0.0
    %867 = vmatpush.msra.mxu0 0.0
    %868 = vmatpush.msra.mxu0 0.0
    %869 = vmatpush.msra.mxu0 0.0
    %870 = vmatpush.msra.mxu0 0.0
    %871 = vmatpush.msra.mxu0 0.0
    %872 = vmatpush.msra.mxu0 0.0
    %873 = vmatpush.msra.mxu0 0.0
    %874 = vmatpush.msra.mxu0 0.0
    %v875 = vand.u32 %v161, 4294901760
    %v876 = vsub.f32 %v161, %v875
    %877 = vmatpush.msra.mxu0 %v876
    %v878 = vand.u32 %v159, 4294901760
    %v879 = vsub.f32 %v159, %v878
    %880 = vmatpush.msra.mxu0 %v879
    %v881 = vand.u32 %v157, 4294901760
    %v882 = vsub.f32 %v157, %v881
    %883 = vmatpush.msra.mxu0 %v882
    %v884 = vand.u32 %v578, 4294901760
    %v885 = vsub.f32 %v578, %v884
    %886 = vmatmul.f32.gmra.mxu0 %v885
    %v887 = vpop.f32.mrf.mxu0
    %v888 = vadd.f32 %v856, %v887
    %v889 = vand.u32 %v581, 4294901760
    %v890 = vsub.f32 %v581, %v889
    %891 = vmatmul.f32.gmra.mxu0 %v890
    %v892 = vpop.f32.mrf.mxu0
    %v893 = vadd.f32 %v860, %v892
    %894 = vdwg.mxu0
    %895 = vmatpush.msra.mxu0 0.0
    %896 = vmatpush.msra.mxu0 0.0
    %897 = vmatpush.msra.mxu0 0.0
    %898 = vmatpush.msra.mxu0 0.0
    %899 = vmatpush.msra.mxu0 0.0
    %900 = vmatpush.msra.mxu0 0.0
    %901 = vmatpush.msra.mxu0 0.0
    %902 = vmatpush.msra.mxu0 0.0
    %903 = vmatpush.msra.mxu0 0.0
    %904 = vmatpush.msra.mxu0 0.0
    %905 = vmatpush.msra.mxu0 0.0
    %906 = vmatpush.msra.mxu0 0.0
    %907 = vmatpush.msra.mxu0 0.0
    %v908 = vand.u32 %v161, 4294901760
    %909 = vmatpush.msra.mxu0 %v908
    %v910 = vand.u32 %v159, 4294901760
    %911 = vmatpush.msra.mxu0 %v910
    %v912 = vand.u32 %v157, 4294901760
    %913 = vmatpush.msra.mxu0 %v912
    %v914 = vand.u32 %v578, 4294901760
    %v915 = vsub.f32 %v578, %v914
    %v916 = vand.u32 %v915, 4294901760
    %917 = vmatmul.f32.gmra.mxu0 %v916
    %v918 = vpop.f32.mrf.mxu0
    %v919 = vadd.f32 %v888, %v918
    %v920 = vand.u32 %v581, 4294901760
    %v921 = vsub.f32 %v581, %v920
    %v922 = vand.u32 %v921, 4294901760
    %923 = vmatmul.f32.gmra.mxu0 %v922
    %v924 = vpop.f32.mrf.mxu0
    %v925 = vadd.f32 %v893, %v924
    %926 = vdwg.mxu0
    %927 = vmatpush.msra.mxu0 0.0
    %928 = vmatpush.msra.mxu0 0.0
    %929 = vmatpush.msra.mxu0 0.0
    %930 = vmatpush.msra.mxu0 0.0
    %931 = vmatpush.msra.mxu0 0.0
    %932 = vmatpush.msra.mxu0 0.0
    %933 = vmatpush.msra.mxu0 0.0
    %934 = vmatpush.msra.mxu0 0.0
    %935 = vmatpush.msra.mxu0 0.0
    %936 = vmatpush.msra.mxu0 0.0
    %937 = vmatpush.msra.mxu0 0.0
    %938 = vmatpush.msra.mxu0 0.0
    %939 = vmatpush.msra.mxu0 0.0
    %v940 = vand.u32 %v161, 4294901760
    %v941 = vsub.f32 %v161, %v940
    %v942 = vand.u32 %v941, 4294901760
    %943 = vmatpush.msra.mxu0 %v942
    %v944 = vand.u32 %v159, 4294901760
    %v945 = vsub.f32 %v159, %v944
    %v946 = vand.u32 %v945, 4294901760
    %947 = vmatpush.msra.mxu0 %v946
    %v948 = vand.u32 %v157, 4294901760
    %v949 = vsub.f32 %v157, %v948
    %v950 = vand.u32 %v949, 4294901760
    %951 = vmatpush.msra.mxu0 %v950
    %v952 = vand.u32 %v578, 4294901760
    %953 = vmatmul.f32.gmra.mxu0 %v952
    %v954 = vpop.f32.mrf.mxu0
    %v955 = vadd.f32 %v919, %v954
    %v956 = vand.u32 %v581, 4294901760
    %957 = vmatmul.f32.gmra.mxu0 %v956
    %v958 = vpop.f32.mrf.mxu0
    %v959 = vadd.f32 %v925, %v958
    %960 = vdwg.mxu0
    %961 = vmatpush.msra.mxu0 0.0
    %962 = vmatpush.msra.mxu0 0.0
    %963 = vmatpush.msra.mxu0 0.0
    %964 = vmatpush.msra.mxu0 0.0
    %965 = vmatpush.msra.mxu0 0.0
    %966 = vmatpush.msra.mxu0 0.0
    %967 = vmatpush.msra.mxu0 0.0
    %968 = vmatpush.msra.mxu0 0.0
    %969 = vmatpush.msra.mxu0 0.0
    %970 = vmatpush.msra.mxu0 0.0
    %971 = vmatpush.msra.mxu0 0.0
    %972 = vmatpush.msra.mxu0 0.0
    %973 = vmatpush.msra.mxu0 0.0
    %v974 = vand.u32 %v161, 4294901760
    %975 = vmatpush.msra.mxu0 %v974
    %v976 = vand.u32 %v159, 4294901760
    %977 = vmatpush.msra.mxu0 %v976
    %v978 = vand.u32 %v157, 4294901760
    %979 = vmatpush.msra.mxu0 %v978
    %v980 = vand.u32 %v578, 4294901760
    %981 = vmatmul.f32.gmra.mxu0 %v980
    %v982 = vpop.f32.mrf.mxu0
    %v983 = vadd.f32 %v955, %v982
    %v984 = vand.u32 %v581, 4294901760
    %985 = vmatmul.f32.gmra.mxu0 %v984
    %v986 = vpop.f32.mrf.mxu0
    %v987 = vadd.f32 %v959, %v986
    %988 = vdwg.mxu0
    %v989 = vld [vmem:[%s2] sm:$0x1]
    %v990 = vmul.f32 %v366, %v366
    %v991 = vmul.f32 %v569, %v569
    %v992 = vmul.f32 %v370, %v370
    %v993 = vmul.f32 %v573, %v573
    %v994 = vsub.f32 %v990, %v780
    %v995 = vsub.f32 %v991, %v983
    %v996 = vsub.f32 %v992, %v784
    %v997 = vsub.f32 %v993, %v987
    %v998 = vadd.f32 %v994, %v996
    %v999 = vrot.slane %v998, 4
    %v1000 = vadd.f32 %v998, %v999
    %v1001 = vrot.slane %v1000, 2
    %v1002 = vadd.f32 %v1000, %v1001
    %v1003 = vrot.slane %v1002, 1
    %v1004 = vadd.f32 %v1002, %v1003
    %v1005 = vadd.f32 %v995, %v997
    %v1006 = vrot.slane %v1005, 4
    %v1007 = vadd.f32 %v1005, %v1006
    %v1008 = vrot.slane %v1007, 2
    %v1009 = vadd.f32 %v1007, %v1008
    %v1010 = vrot.slane %v1009, 1
    %v1011 = vadd.f32 %v1009, %v1010
    %v1012 = vmul.f32 %v1004, 0.5
    %v1013 = vmul.f32 %v1011, 0.5
    %v1015 = vsel %vm162, %v989, 0
    %1017 = vmatpush.msra.mxu0 0.0
    %1018 = vmatpush.msra.mxu0 0.0
    %1019 = vmatpush.msra.mxu0 0.0
    %1020 = vmatpush.msra.mxu0 0.0
    %1021 = vmatpush.msra.mxu0 0.0
    %1022 = vmatpush.msra.mxu0 0.0
    %1023 = vmatpush.msra.mxu0 0.0
    %1024 = vmatpush.msra.mxu0 0.0
    %1025 = vmatpush.msra.mxu0 0.0
    %1026 = vmatpush.msra.mxu0 0.0
    %1027 = vmatpush.msra.mxu0 0.0
    %1028 = vmatpush.msra.mxu0 0.0
    %1029 = vmatpush.msra.mxu0 0.0
    %v1030 = vand.u32 %v160, 4294901760
    %1031 = vmatpush.msra.mxu0 %v1030
    %v1032 = vand.u32 %v158, 4294901760
    %1033 = vmatpush.msra.mxu0 %v1032
    %v1034 = vand.u32 %v156, 4294901760
    %1035 = vmatpush.msra.mxu0 %v1034
    %v1036 = vand.u32 %v1015, 4294901760
    %v1037 = vsub.f32 %v1015, %v1036
    %v1038 = vand.u32 %v1037, 4294901760
    %v1039 = vsub.f32 %v1037, %v1038
    %v1040 = vand.u32 %v1039, 4294901760
    %1041 = vmatmul.f32.gmra.mxu0 %v1040
    %v1042 = vpop.f32.mrf.mxu0
    %v1043 = vadd.f32 %v1012, %v1042
    %1044 = vdwg.mxu0
    %1045 = vmatpush.msra.mxu0 0.0
    %1046 = vmatpush.msra.mxu0 0.0
    %1047 = vmatpush.msra.mxu0 0.0
    %1048 = vmatpush.msra.mxu0 0.0
    %1049 = vmatpush.msra.mxu0 0.0
    %1050 = vmatpush.msra.mxu0 0.0
    %1051 = vmatpush.msra.mxu0 0.0
    %1052 = vmatpush.msra.mxu0 0.0
    %1053 = vmatpush.msra.mxu0 0.0
    %1054 = vmatpush.msra.mxu0 0.0
    %1055 = vmatpush.msra.mxu0 0.0
    %1056 = vmatpush.msra.mxu0 0.0
    %1057 = vmatpush.msra.mxu0 0.0
    %v1058 = vand.u32 %v160, 4294901760
    %v1059 = vsub.f32 %v160, %v1058
    %v1060 = vand.u32 %v1059, 4294901760
    %v1061 = vsub.f32 %v1059, %v1060
    %v1062 = vand.u32 %v1061, 4294901760
    %1063 = vmatpush.msra.mxu0 %v1062
    %v1064 = vand.u32 %v158, 4294901760
    %v1065 = vsub.f32 %v158, %v1064
    %v1066 = vand.u32 %v1065, 4294901760
    %v1067 = vsub.f32 %v1065, %v1066
    %v1068 = vand.u32 %v1067, 4294901760
    %1069 = vmatpush.msra.mxu0 %v1068
    %v1070 = vand.u32 %v156, 4294901760
    %v1071 = vsub.f32 %v156, %v1070
    %v1072 = vand.u32 %v1071, 4294901760
    %v1073 = vsub.f32 %v1071, %v1072
    %v1074 = vand.u32 %v1073, 4294901760
    %1075 = vmatpush.msra.mxu0 %v1074
    %v1076 = vand.u32 %v1015, 4294901760
    %1077 = vmatmul.f32.gmra.mxu0 %v1076
    %v1078 = vpop.f32.mrf.mxu0
    %v1079 = vadd.f32 %v1043, %v1078
    %1080 = vdwg.mxu0
    %1081 = vmatpush.msra.mxu0 0.0
    %1082 = vmatpush.msra.mxu0 0.0
    %1083 = vmatpush.msra.mxu0 0.0
    %1084 = vmatpush.msra.mxu0 0.0
    %1085 = vmatpush.msra.mxu0 0.0
    %1086 = vmatpush.msra.mxu0 0.0
    %1087 = vmatpush.msra.mxu0 0.0
    %1088 = vmatpush.msra.mxu0 0.0
    %1089 = vmatpush.msra.mxu0 0.0
    %1090 = vmatpush.msra.mxu0 0.0
    %1091 = vmatpush.msra.mxu0 0.0
    %1092 = vmatpush.msra.mxu0 0.0
    %1093 = vmatpush.msra.mxu0 0.0
    %v1094 = vand.u32 %v160, 4294901760
    %v1095 = vsub.f32 %v160, %v1094
    %1096 = vmatpush.msra.mxu0 %v1095
    %v1097 = vand.u32 %v158, 4294901760
    %v1098 = vsub.f32 %v158, %v1097
    %1099 = vmatpush.msra.mxu0 %v1098
    %v1100 = vand.u32 %v156, 4294901760
    %v1101 = vsub.f32 %v156, %v1100
    %1102 = vmatpush.msra.mxu0 %v1101
    %v1103 = vand.u32 %v1015, 4294901760
    %v1104 = vsub.f32 %v1015, %v1103
    %1105 = vmatmul.f32.gmra.mxu0 %v1104
    %v1106 = vpop.f32.mrf.mxu0
    %v1107 = vadd.f32 %v1079, %v1106
    %1108 = vdwg.mxu0
    %1109 = vmatpush.msra.mxu0 0.0
    %1110 = vmatpush.msra.mxu0 0.0
    %1111 = vmatpush.msra.mxu0 0.0
    %1112 = vmatpush.msra.mxu0 0.0
    %1113 = vmatpush.msra.mxu0 0.0
    %1114 = vmatpush.msra.mxu0 0.0
    %1115 = vmatpush.msra.mxu0 0.0
    %1116 = vmatpush.msra.mxu0 0.0
    %1117 = vmatpush.msra.mxu0 0.0
    %1118 = vmatpush.msra.mxu0 0.0
    %1119 = vmatpush.msra.mxu0 0.0
    %1120 = vmatpush.msra.mxu0 0.0
    %1121 = vmatpush.msra.mxu0 0.0
    %v1122 = vand.u32 %v160, 4294901760
    %1123 = vmatpush.msra.mxu0 %v1122
    %v1124 = vand.u32 %v158, 4294901760
    %1125 = vmatpush.msra.mxu0 %v1124
    %v1126 = vand.u32 %v156, 4294901760
    %1127 = vmatpush.msra.mxu0 %v1126
    %v1128 = vand.u32 %v1015, 4294901760
    %v1129 = vsub.f32 %v1015, %v1128
    %v1130 = vand.u32 %v1129, 4294901760
    %1131 = vmatmul.f32.gmra.mxu0 %v1130
    %v1132 = vpop.f32.mrf.mxu0
    %v1133 = vadd.f32 %v1107, %v1132
    %1134 = vdwg.mxu0
    %1135 = vmatpush.msra.mxu0 0.0
    %1136 = vmatpush.msra.mxu0 0.0
    %1137 = vmatpush.msra.mxu0 0.0
    %1138 = vmatpush.msra.mxu0 0.0
    %1139 = vmatpush.msra.mxu0 0.0
    %1140 = vmatpush.msra.mxu0 0.0
    %1141 = vmatpush.msra.mxu0 0.0
    %1142 = vmatpush.msra.mxu0 0.0
    %1143 = vmatpush.msra.mxu0 0.0
    %1144 = vmatpush.msra.mxu0 0.0
    %1145 = vmatpush.msra.mxu0 0.0
    %1146 = vmatpush.msra.mxu0 0.0
    %1147 = vmatpush.msra.mxu0 0.0
    %v1148 = vand.u32 %v160, 4294901760
    %v1149 = vsub.f32 %v160, %v1148
    %v1150 = vand.u32 %v1149, 4294901760
    %1151 = vmatpush.msra.mxu0 %v1150
    %v1152 = vand.u32 %v158, 4294901760
    %v1153 = vsub.f32 %v158, %v1152
    %v1154 = vand.u32 %v1153, 4294901760
    %1155 = vmatpush.msra.mxu0 %v1154
    %v1156 = vand.u32 %v156, 4294901760
    %v1157 = vsub.f32 %v156, %v1156
    %v1158 = vand.u32 %v1157, 4294901760
    %1159 = vmatpush.msra.mxu0 %v1158
    %v1160 = vand.u32 %v1015, 4294901760
    %1161 = vmatmul.f32.gmra.mxu0 %v1160
    %v1162 = vpop.f32.mrf.mxu0
    %v1163 = vadd.f32 %v1133, %v1162
    %1164 = vdwg.mxu0
    %1165 = vmatpush.msra.mxu0 0.0
    %1166 = vmatpush.msra.mxu0 0.0
    %1167 = vmatpush.msra.mxu0 0.0
    %1168 = vmatpush.msra.mxu0 0.0
    %1169 = vmatpush.msra.mxu0 0.0
    %1170 = vmatpush.msra.mxu0 0.0
    %1171 = vmatpush.msra.mxu0 0.0
    %1172 = vmatpush.msra.mxu0 0.0
    %1173 = vmatpush.msra.mxu0 0.0
    %1174 = vmatpush.msra.mxu0 0.0
    %1175 = vmatpush.msra.mxu0 0.0
    %1176 = vmatpush.msra.mxu0 0.0
    %1177 = vmatpush.msra.mxu0 0.0
    %v1178 = vand.u32 %v160, 4294901760
    %1179 = vmatpush.msra.mxu0 %v1178
    %v1180 = vand.u32 %v158, 4294901760
    %1181 = vmatpush.msra.mxu0 %v1180
    %v1182 = vand.u32 %v156, 4294901760
    %1183 = vmatpush.msra.mxu0 %v1182
    %v1184 = vand.u32 %v1015, 4294901760
    %1185 = vmatmul.f32.gmra.mxu0 %v1184
    %v1186 = vpop.f32.mrf.mxu0
    %v1187 = vadd.f32 %v1163, %v1186
    %1188 = vdwg.mxu0
    %1189 = vmatpush.msra.mxu0 0.0
    %1190 = vmatpush.msra.mxu0 0.0
    %1191 = vmatpush.msra.mxu0 0.0
    %1192 = vmatpush.msra.mxu0 0.0
    %1193 = vmatpush.msra.mxu0 0.0
    %1194 = vmatpush.msra.mxu0 0.0
    %1195 = vmatpush.msra.mxu0 0.0
    %1196 = vmatpush.msra.mxu0 0.0
    %1197 = vmatpush.msra.mxu0 0.0
    %1198 = vmatpush.msra.mxu0 0.0
    %1199 = vmatpush.msra.mxu0 0.0
    %1200 = vmatpush.msra.mxu0 0.0
    %1201 = vmatpush.msra.mxu0 0.0
    %v1202 = vand.u32 %v161, 4294901760
    %1203 = vmatpush.msra.mxu0 %v1202
    %v1204 = vand.u32 %v159, 4294901760
    %1205 = vmatpush.msra.mxu0 %v1204
    %v1206 = vand.u32 %v157, 4294901760
    %1207 = vmatpush.msra.mxu0 %v1206
    %v1208 = vand.u32 %v1015, 4294901760
    %v1209 = vsub.f32 %v1015, %v1208
    %v1210 = vand.u32 %v1209, 4294901760
    %v1211 = vsub.f32 %v1209, %v1210
    %v1212 = vand.u32 %v1211, 4294901760
    %1213 = vmatmul.f32.gmra.mxu0 %v1212
    %v1214 = vpop.f32.mrf.mxu0
    %v1215 = vadd.f32 %v1013, %v1214
    %1216 = vdwg.mxu0
    %1217 = vmatpush.msra.mxu0 0.0
    %1218 = vmatpush.msra.mxu0 0.0
    %1219 = vmatpush.msra.mxu0 0.0
    %1220 = vmatpush.msra.mxu0 0.0
    %1221 = vmatpush.msra.mxu0 0.0
    %1222 = vmatpush.msra.mxu0 0.0
    %1223 = vmatpush.msra.mxu0 0.0
    %1224 = vmatpush.msra.mxu0 0.0
    %1225 = vmatpush.msra.mxu0 0.0
    %1226 = vmatpush.msra.mxu0 0.0
    %1227 = vmatpush.msra.mxu0 0.0
    %1228 = vmatpush.msra.mxu0 0.0
    %1229 = vmatpush.msra.mxu0 0.0
    %v1230 = vand.u32 %v161, 4294901760
    %v1231 = vsub.f32 %v161, %v1230
    %v1232 = vand.u32 %v1231, 4294901760
    %v1233 = vsub.f32 %v1231, %v1232
    %v1234 = vand.u32 %v1233, 4294901760
    %1235 = vmatpush.msra.mxu0 %v1234
    %v1236 = vand.u32 %v159, 4294901760
    %v1237 = vsub.f32 %v159, %v1236
    %v1238 = vand.u32 %v1237, 4294901760
    %v1239 = vsub.f32 %v1237, %v1238
    %v1240 = vand.u32 %v1239, 4294901760
    %1241 = vmatpush.msra.mxu0 %v1240
    %v1242 = vand.u32 %v157, 4294901760
    %v1243 = vsub.f32 %v157, %v1242
    %v1244 = vand.u32 %v1243, 4294901760
    %v1245 = vsub.f32 %v1243, %v1244
    %v1246 = vand.u32 %v1245, 4294901760
    %1247 = vmatpush.msra.mxu0 %v1246
    %v1248 = vand.u32 %v1015, 4294901760
    %1249 = vmatmul.f32.gmra.mxu0 %v1248
    %v1250 = vpop.f32.mrf.mxu0
    %v1251 = vadd.f32 %v1215, %v1250
    %1252 = vdwg.mxu0
    %1253 = vmatpush.msra.mxu0 0.0
    %1254 = vmatpush.msra.mxu0 0.0
    %1255 = vmatpush.msra.mxu0 0.0
    %1256 = vmatpush.msra.mxu0 0.0
    %1257 = vmatpush.msra.mxu0 0.0
    %1258 = vmatpush.msra.mxu0 0.0
    %1259 = vmatpush.msra.mxu0 0.0
    %1260 = vmatpush.msra.mxu0 0.0
    %1261 = vmatpush.msra.mxu0 0.0
    %1262 = vmatpush.msra.mxu0 0.0
    %1263 = vmatpush.msra.mxu0 0.0
    %1264 = vmatpush.msra.mxu0 0.0
    %1265 = vmatpush.msra.mxu0 0.0
    %v1266 = vand.u32 %v161, 4294901760
    %v1267 = vsub.f32 %v161, %v1266
    %1268 = vmatpush.msra.mxu0 %v1267
    %v1269 = vand.u32 %v159, 4294901760
    %v1270 = vsub.f32 %v159, %v1269
    %1271 = vmatpush.msra.mxu0 %v1270
    %v1272 = vand.u32 %v157, 4294901760
    %v1273 = vsub.f32 %v157, %v1272
    %1274 = vmatpush.msra.mxu0 %v1273
    %v1275 = vand.u32 %v1015, 4294901760
    %v1276 = vsub.f32 %v1015, %v1275
    %1277 = vmatmul.f32.gmra.mxu0 %v1276
    %v1278 = vpop.f32.mrf.mxu0
    %v1279 = vadd.f32 %v1251, %v1278
    %1280 = vdwg.mxu0
    %1281 = vmatpush.msra.mxu0 0.0
    %1282 = vmatpush.msra.mxu0 0.0
    %1283 = vmatpush.msra.mxu0 0.0
    %1284 = vmatpush.msra.mxu0 0.0
    %1285 = vmatpush.msra.mxu0 0.0
    %1286 = vmatpush.msra.mxu0 0.0
    %1287 = vmatpush.msra.mxu0 0.0
    %1288 = vmatpush.msra.mxu0 0.0
    %1289 = vmatpush.msra.mxu0 0.0
    %1290 = vmatpush.msra.mxu0 0.0
    %1291 = vmatpush.msra.mxu0 0.0
    %1292 = vmatpush.msra.mxu0 0.0
    %1293 = vmatpush.msra.mxu0 0.0
    %v1294 = vand.u32 %v161, 4294901760
    %1295 = vmatpush.msra.mxu0 %v1294
    %v1296 = vand.u32 %v159, 4294901760
    %1297 = vmatpush.msra.mxu0 %v1296
    %v1298 = vand.u32 %v157, 4294901760
    %1299 = vmatpush.msra.mxu0 %v1298
    %v1300 = vand.u32 %v1015, 4294901760
    %v1301 = vsub.f32 %v1015, %v1300
    %v1302 = vand.u32 %v1301, 4294901760
    %1303 = vmatmul.f32.gmra.mxu0 %v1302
    %v1304 = vpop.f32.mrf.mxu0
    %v1305 = vadd.f32 %v1279, %v1304
    %1306 = vdwg.mxu0
    %1307 = vmatpush.msra.mxu0 0.0
    %1308 = vmatpush.msra.mxu0 0.0
    %1309 = vmatpush.msra.mxu0 0.0
    %1310 = vmatpush.msra.mxu0 0.0
    %1311 = vmatpush.msra.mxu0 0.0
    %1312 = vmatpush.msra.mxu0 0.0
    %1313 = vmatpush.msra.mxu0 0.0
    %1314 = vmatpush.msra.mxu0 0.0
    %1315 = vmatpush.msra.mxu0 0.0
    %1316 = vmatpush.msra.mxu0 0.0
    %1317 = vmatpush.msra.mxu0 0.0
    %1318 = vmatpush.msra.mxu0 0.0
    %1319 = vmatpush.msra.mxu0 0.0
    %v1320 = vand.u32 %v161, 4294901760
    %v1321 = vsub.f32 %v161, %v1320
    %v1322 = vand.u32 %v1321, 4294901760
    %1323 = vmatpush.msra.mxu0 %v1322
    %v1324 = vand.u32 %v159, 4294901760
    %v1325 = vsub.f32 %v159, %v1324
    %v1326 = vand.u32 %v1325, 4294901760
    %1327 = vmatpush.msra.mxu0 %v1326
    %v1328 = vand.u32 %v157, 4294901760
    %v1329 = vsub.f32 %v157, %v1328
    %v1330 = vand.u32 %v1329, 4294901760
    %1331 = vmatpush.msra.mxu0 %v1330
    %v1332 = vand.u32 %v1015, 4294901760
    %1333 = vmatmul.f32.gmra.mxu0 %v1332
    %v1334 = vpop.f32.mrf.mxu0
    %v1335 = vadd.f32 %v1305, %v1334
    %1336 = vdwg.mxu0
    %1337 = vmatpush.msra.mxu0 0.0
    %1338 = vmatpush.msra.mxu0 0.0
    %1339 = vmatpush.msra.mxu0 0.0
    %1340 = vmatpush.msra.mxu0 0.0
    %1341 = vmatpush.msra.mxu0 0.0
    %1342 = vmatpush.msra.mxu0 0.0
    %1343 = vmatpush.msra.mxu0 0.0
    %1344 = vmatpush.msra.mxu0 0.0
    %1345 = vmatpush.msra.mxu0 0.0
    %1346 = vmatpush.msra.mxu0 0.0
    %1347 = vmatpush.msra.mxu0 0.0
    %1348 = vmatpush.msra.mxu0 0.0
    %1349 = vmatpush.msra.mxu0 0.0
    %v1350 = vand.u32 %v161, 4294901760
    %1351 = vmatpush.msra.mxu0 %v1350
    %v1352 = vand.u32 %v159, 4294901760
    %1353 = vmatpush.msra.mxu0 %v1352
    %v1354 = vand.u32 %v157, 4294901760
    %1355 = vmatpush.msra.mxu0 %v1354
    %v1356 = vand.u32 %v1015, 4294901760
    %1357 = vmatmul.f32.gmra.mxu0 %v1356
    %v1358 = vpop.f32.mrf.mxu0
    %v1359 = vadd.f32 %v1335, %v1358
    %1360 = vdwg.mxu0
    %s1361 = sld [smem:[#allocation2]]
    %v1362 = vstv %s1361
    %v1363 = vadd.f32 %v1187, %v1362
    %v1364 = vadd.f32 %v1359, %v1362
    %v1365 = vxor.u32 %v1363, 2147483648
    %v1366 = vxor.u32 %v1364, 2147483648
    %v1367 = vmul.f32 %v1365, 1.442695
    %v1368 = vpow.pop %v1367
    %v1369 = vmul.f32 %v1366, 1.442695
    %v1370 = vpow.pop %v1369
    %v1371 = vadd.f32 %v1368, 1.0
    %v1372 = vadd.f32 %v1370, 1.0
    %v1373 = vrcp.pop %v1371
    %v1374 = vmul.f32 %v1371, %v1373
    %v1375 = vsub.f32 1.0, %v1374
    %v1376 = vmul.f32 %v1373, %v1375
    %v1377 = vadd.f32 %v1373, %v1376
    %vm1378 = vweird.f32 %v1371
    %vm1379 = vweird.f32 %v1373
    %vm1380 = vmor %vm1378, %vm1379
    %v1381 = vsel %vm1380, %v1373, %v1377
    %v1382 = vand.u32 2147483647, %v1371
    %vm1383 = vcmp.eq.f32.partialorder %v1382, 8.507059e+37
    %v1384 = vand.u32 %v1371, 2147483648
    %v1385 = vor.u32 1.1754944e-38, %v1384
    %v1386 = vsel %vm1383, %v1385, %v1381
    %v1387 = vmul.f32 1.0, %v1386
    %v1388 = vrcp.pop %v1372
    %v1389 = vmul.f32 %v1372, %v1388
    %v1390 = vsub.f32 1.0, %v1389
    %v1391 = vmul.f32 %v1388, %v1390
    %v1392 = vadd.f32 %v1388, %v1391
    %vm1393 = vweird.f32 %v1372
    %vm1394 = vweird.f32 %v1388
    %vm1395 = vmor %vm1393, %vm1394
    %v1396 = vsel %vm1395, %v1388, %v1392
    %v1397 = vand.u32 2147483647, %v1372
    %vm1398 = vcmp.eq.f32.partialorder %v1397, 8.507059e+37
    %v1399 = vand.u32 %v1372, 2147483648
    %v1400 = vor.u32 1.1754944e-38, %v1399
    %v1401 = vsel %vm1398, %v1400, %v1396
    %v1402 = vmul.f32 1.0, %v1401
    %v1405 = vrot.slane %v1402, 7
    %vm1406 = vcmask 1040384
    %v1407 = vsel %vm1406, %v1387, %v1405
    %v1409 = vlaneseq
    %vm1410 = vcmp.ge.s32.totalorder %v1409, 0
    %vm1411 = vcmp.lt.s32.totalorder %v1409, 256
    %vm1412 = vmand %vm1410, %vm1411
    %1413 = vst.msk [vmem:[#allocation8] sm:$0x3] %vm1412, %v1407
    // Predicated region
    $region26: #{tpu_custom_call.1} parent=1 // pred_check
      _
    $region27: #{tpu_custom_call.1} parent=1 // pred_check_branch
      %1415 = sbr.rel (0) target = $region29
    $region28: #{tpu_custom_call.1} parent=1 // pred_region
      %1417 = vsyncadd [#allocation5], 0
      %s1419 = sshll.u32 [#allocation8], 4
      %s1420 = int_to_ptr.vmem [resolvable:$true] %s1419
      %s1421 = sshll.u32 %s4, 4
      %s1422 = int_to_ptr.hbm [resolvable:$true] %s1421
      %1424 = dma.vmem_to_hbm [thread:$0]  %s1420, 32, %s1422, [#allocation5]
    $region29: #{tpu_custom_call.1} parent=1 // pred_fallthru
      _
    // Predicated region
    $region30: #{tpu_custom_call.1} parent=1 // pred_check
      _
    $region31: #{tpu_custom_call.1} parent=1 // pred_check_branch
      %1426 = sbr.rel (0) target = $region33
    $region32: #{tpu_custom_call.1} parent=1 // pred_region
      %1428 = dma.done [#allocation5], 32
    $region33: #{tpu_custom_call.1} parent=1 // pred_fallthru
      _
    %1429 = vsyncpa [#allocation4], 1
    %1430 = vsyncpa [#allocation7], 1
    %1431 = vsyncpa [#allocation5], 1

</llo_original>
